<compile_context>
chip_gen: v6e
topology: v6e:2x2x1
jax: 0.10.0
libtpu: 0.0.40
codegen_flags: <defaults>
</compile_context>

<pallas_src>
import math
import jax
import jax.numpy as jnp
from jax.experimental import pallas as pl
from jax.experimental.pallas import tpu as pltpu

IMG_SIZE = 28 * 20   # 560, fixed by the module
DEC_W = 1152         # 9*128 lanes: [dec_mu 0:560 | dec_logvar 560:1120 | pad]
ENC_W = 128          # 1*128 lanes: [enc_mu 0:n | enc_logvar n:2n | pad]


def _round_up(x, m):
    return (x + m - 1) // m * m


def _nbytes(shape, dtype):
    return math.prod(shape) * jnp.dtype(dtype).itemsize


def _vae_kernel(
    x_ref,        # (TB, 560)     bf16
    w_he_ref,     # (560, H)      bf16
    b_he_ref,     # (1, H)        f32
    w_enc_ref,    # (H, ENC_W)    bf16   [mu | logvar | 0-pad]
    b_enc_ref,    # (1, ENC_W)    f32
    w_hd_ref,     # (N, H)        bf16
    b_hd_ref,     # (1, H)        f32
    w_dec_ref,    # (H, DEC_W)    bf16   [mu 0:560 | logvar 560:1120 | 0-pad]
    b_dec_ref,    # (1, DEC_W)    f32
    noise_ref,    # (TB, N)       f32
    enc_out_ref,  # (TB, ENC_W)   f32    lane-dense fused (mu | logvar)
    dec_out_ref,  # (TB, DEC_W)   f32    lane-dense fused (mu | logvar)
):
    n = noise_ref.shape[-1]

    # ---- encoder ----
    h_e = jnp.tanh(
        jnp.dot(x_ref[...], w_he_ref[...], preferred_element_type=jnp.float32)
        + b_he_ref[...]
    )
    enc = (
        jnp.dot(h_e.astype(jnp.bfloat16), w_enc_ref[...],
                preferred_element_type=jnp.float32)
        + b_enc_ref[...]
    )
    enc_out_ref[...] = enc  # single unmasked lane-dense store

    mu = enc[:, :n]
    logvar = enc[:, n:2 * n]

    # ---- reparameterization: z = mu + exp(0.5 * logvar) * eps ----
    z = mu + jnp.exp(0.5 * logvar) * noise_ref[...]

    # ---- decoder ----
    h_d = jnp.tanh(
        jnp.dot(z.astype(jnp.bfloat16), w_hd_ref[...],
                preferred_element_type=jnp.float32)
        + b_hd_ref[...]
    )
    dec = (
        jnp.dot(h_d.astype(jnp.bfloat16), w_dec_ref[...],
                preferred_element_type=jnp.float32)
        + b_dec_ref[...]
    )
    # 560 is not lane-aligned: select sigmoid (mu cols) vs tanh (logvar cols)
    # with a column mask; the extra transcendental on masked lanes is free
    # (EUP/VPU slack) and the store stays one unmasked lane-dense slab.
    col = jax.lax.broadcasted_iota(jnp.int32, dec.shape, dimension=1)
    dec_out_ref[...] = jnp.where(col < IMG_SIZE,
                                 jax.nn.sigmoid(dec), jnp.tanh(dec))


def init_params(key, h, n):
    """torch.nn.Linear-style init; weights stored (in, out) so kernel does x@W+b."""
    def linear(k, fan_in, fan_out):
        kw, kb = jax.random.split(k)
        bound = 1.0 / math.sqrt(fan_in)
        w = jax.random.uniform(kw, (fan_in, fan_out), jnp.float32, -bound, bound)
        b = jax.random.uniform(kb, (1, fan_out), jnp.float32, -bound, bound)
        return w, b

    ks = jax.random.split(key, 6)
    return {
        "h_encoder": linear(ks[0], IMG_SIZE, h),
        "h_mu_encoder": linear(ks[1], h, n),
        "h_logvar_encoder": linear(ks[2], h, n),
        "h_decoder": linear(ks[3], n, h),
        "h_mu_decoder": linear(ks[4], h, IMG_SIZE),
        "h_logvar_decoder": linear(ks[5], h, IMG_SIZE),
    }


def pack_params(params, n):
    """Fuse mu/logvar heads, pad to lane-dense widths, cast weights to bf16."""
    w_he, b_he = params["h_encoder"]
    w_mue, b_mue = params["h_mu_encoder"]
    w_lve, b_lve = params["h_logvar_encoder"]
    w_hd, b_hd = params["h_decoder"]
    w_mud, b_mud = params["h_mu_decoder"]
    w_lvd, b_lvd = params["h_logvar_decoder"]
    h = w_he.shape[1]

    w_enc = jnp.zeros((h, ENC_W), jnp.float32)
    w_enc = w_enc.at[:, :n].set(w_mue).at[:, n:2 * n].set(w_lve)
    b_enc = jnp.zeros((1, ENC_W), jnp.float32)
    b_enc = b_enc.at[:, :n].set(b_mue).at[:, n:2 * n].set(b_lve)

    # Tight decoder packing: mu at 0..559, logvar at 560..1119, pad to 1152.
    w_dec = jnp.zeros((h, DEC_W), jnp.float32)
    w_dec = (w_dec.at[:, :IMG_SIZE].set(w_mud)
                  .at[:, IMG_SIZE:2 * IMG_SIZE].set(w_lvd))
    b_dec = jnp.zeros((1, DEC_W), jnp.float32)
    b_dec = (b_dec.at[:, :IMG_SIZE].set(b_mud)
                  .at[:, IMG_SIZE:2 * IMG_SIZE].set(b_lvd))

    return {
        "w_he": w_he.astype(jnp.bfloat16), "b_he": b_he,
        "w_enc": w_enc.astype(jnp.bfloat16), "b_enc": b_enc,
        "w_hd": w_hd.astype(jnp.bfloat16), "b_hd": b_hd,
        "w_dec": w_dec.astype(jnp.bfloat16), "b_dec": b_dec,
    }


def vae_forward(x, packed, noise, *, tile_b=1024):
    """x: (B, 1, 28, 20) NCHW (anything that flattens row-major to (-1, 560))."""
    # bf16 input stream: halves the x HBM bytes (review item 1).
    x2d = x.reshape(-1, IMG_SIZE).astype(jnp.bfloat16)
    noise = noise.astype(jnp.float32)
    B = x2d.shape[0]
    n = noise.shape[-1]

    # Pad only to an 8-row sublane multiple (<= 7 rows), never a full-tile copy.
    b8 = _round_up(B, 8)
    if b8 != B:
        x2d = jnp.pad(x2d, ((0, b8 - B), (0, 0)))
        noise = jnp.pad(noise, ((0, b8 - B), (0, 0)))

    # Batch tile: as large as practical (amortizes ~0.35 us/grid-step), but
    # capped so the grid has >= 2 steps when there is enough work — on v7x the
    # "parallel" axis is what lets the two TensorCores split the batch.
    two_step_cap = max(8, _round_up(pl.cdiv(b8, 2), 8))
    tb = max(8, min(tile_b, two_step_cap))
    grid = (pl.cdiv(b8, tb),)

    # Scoped-VMEM budget from the actual double-buffered tile sizes
    # (v7x: 64 MiB physical / 32 MiB scoped default — stay well under).
    io_bytes = 2 * (_nbytes((tb, IMG_SIZE), jnp.bfloat16)
                    + _nbytes((tb, n), jnp.float32)
                    + _nbytes((tb, ENC_W), jnp.float32)
                    + _nbytes((tb, DEC_W), jnp.float32))
    w_bytes = 2 * sum(int(v.size) * v.dtype.itemsize for v in packed.values())
    vmem_limit = int((io_bytes + w_bytes) * 1.25) + (4 << 20)
    vmem_limit = min(max(vmem_limit, 16 << 20), 48 << 20)

    def resident(arr):  # weights/biases: same block every grid step (stay in VMEM)
        return pl.BlockSpec(arr.shape, lambda i: (0, 0))

    in_specs = [
        pl.BlockSpec((tb, IMG_SIZE), lambda i: (i, 0)),     # x tile (bf16)
        resident(packed["w_he"]), resident(packed["b_he"]),
        resident(packed["w_enc"]), resident(packed["b_enc"]),
        resident(packed["w_hd"]), resident(packed["b_hd"]),
        resident(packed["w_dec"]), resident(packed["b_dec"]),
        pl.BlockSpec((tb, n), lambda i: (i, 0)),            # noise tile
    ]
    out_specs = (
        pl.BlockSpec((tb, ENC_W), lambda i: (i, 0)),
        pl.BlockSpec((tb, DEC_W), lambda i: (i, 0)),
    )
    out_shape = (
        jax.ShapeDtypeStruct((b8, ENC_W), jnp.float32),
        jax.ShapeDtypeStruct((b8, DEC_W), jnp.float32),
    )

    enc, dec = pl.pallas_call(
        _vae_kernel,
        grid=grid,
        in_specs=in_specs,
        out_specs=out_specs,
        out_shape=out_shape,
        compiler_params=pltpu.CompilerParams(
            dimension_semantics=("parallel",),
            vmem_limit_bytes=vmem_limit),
    )(
        x2d,
        packed["w_he"], packed["b_he"],
        packed["w_enc"], packed["b_enc"],
        packed["w_hd"], packed["b_hd"],
        packed["w_dec"], packed["b_dec"],
        noise,
    )

    mean_enc = enc[:B, :n]
    logvar_enc = enc[:B, n:2 * n]
    mean_dec = dec[:B, :IMG_SIZE]
    logvar_dec = dec[:B, IMG_SIZE:2 * IMG_SIZE]
    return mean_enc, logvar_enc, mean_dec, logvar_dec


if __name__ == "__main__":
    H = 32   # hidden size h
    N = 8    # latent size n
    B = 2    # batch (small demo; kernel pads to an 8-row tile)

    root = jax.random.PRNGKey(0)
    k_params, k_x, k_noise = jax.random.split(root, 3)

    params = init_params(k_params, H, N)
    packed = pack_params(params, N)
    x = jax.random.uniform(k_x, (B, 1, 28, 20), jnp.float32)   # NCHW image
    noise = jax.random.normal(k_noise, (B, N), jnp.float32)    # randn_like(sd)

    mean_enc, logvar_enc, mean_dec, logvar_dec = jax.block_until_ready(
        vae_forward(x, packed, noise)
    )

    # sanity reference: same math with identical bf16 matmul operands / f32 acc
    def bdot(a, w):
        return jnp.dot(a.astype(jnp.bfloat16), w.astype(jnp.bfloat16),
                       preferred_element_type=jnp.float32)

    x2d = x.reshape(-1, IMG_SIZE)
    h_e = jnp.tanh(bdot(x2d, params["h_encoder"][0]) + params["h_encoder"][1])
    m_e = bdot(h_e, params["h_mu_encoder"][0]) + params["h_mu_encoder"][1]
    lv_e = bdot(h_e, params["h_logvar_encoder"][0]) + params["h_logvar_encoder"][1]
    z = m_e + jnp.exp(0.5 * lv_e) * noise
    h_d = jnp.tanh(bdot(z, params["h_decoder"][0]) + params["h_decoder"][1])
    m_d = jax.nn.sigmoid(bdot(h_d, params["h_mu_decoder"][0]) + params["h_mu_decoder"][1])
    lv_d = jnp.tanh(bdot(h_d, params["h_logvar_decoder"][0]) + params["h_logvar_decoder"][1])

    assert mean_enc.shape == (B, N) and logvar_enc.shape == (B, N)
    assert mean_dec.shape == (B, IMG_SIZE) and logvar_dec.shape == (B, IMG_SIZE)
    assert jnp.allclose(mean_enc, m_e, atol=2e-3, rtol=2e-3)
    assert jnp.allclose(logvar_enc, lv_e, atol=2e-3, rtol=2e-3)
    assert jnp.allclose(mean_dec, m_d, atol=2e-3, rtol=2e-3)
    assert jnp.allclose(logvar_dec, lv_d, atol=2e-3, rtol=2e-3)

    print("KERNEL_OK")
</pallas_src>

<mosaic_0001>
module attributes {stable_mosaic.version = 11 : i64} {
  func.func @_vae_kernel(%arg0: i32, %arg1: memref<8x560xbf16, #tpu.memory_space<vmem>>, %arg2: memref<560x32xbf16, #tpu.memory_space<vmem>>, %arg3: memref<1x32xf32, #tpu.memory_space<vmem>>, %arg4: memref<32x128xbf16, #tpu.memory_space<vmem>>, %arg5: memref<1x128xf32, #tpu.memory_space<vmem>>, %arg6: memref<8x32xbf16, #tpu.memory_space<vmem>>, %arg7: memref<1x32xf32, #tpu.memory_space<vmem>>, %arg8: memref<32x1152xbf16, #tpu.memory_space<vmem>>, %arg9: memref<1x1152xf32, #tpu.memory_space<vmem>>, %arg10: memref<8x8xf32, #tpu.memory_space<vmem>>, %arg11: memref<8x128xf32, #tpu.memory_space<vmem>>, %arg12: memref<8x1152xf32, #tpu.memory_space<vmem>>) attributes {dimension_semantics = [#tpu.dimension_semantics<parallel>], iteration_bounds = array<i64: 1>, scalar_prefetch = 0 : i64, scratch_operands = 0 : i64, tpu.core_type = #tpu.core_type<tc>, window_params = [{transform_indices = @transform_0, window_bounds = array<i64: 8, 560>}, {pipeline_mode = #tpu.pipeline_mode<synchronous>, transform_indices = @transform_1, window_bounds = array<i64: 560, 32>}, {pipeline_mode = #tpu.pipeline_mode<synchronous>, transform_indices = @transform_2, window_bounds = array<i64: 1, 32>}, {pipeline_mode = #tpu.pipeline_mode<synchronous>, transform_indices = @transform_3, window_bounds = array<i64: 32, 128>}, {pipeline_mode = #tpu.pipeline_mode<synchronous>, transform_indices = @transform_4, window_bounds = array<i64: 1, 128>}, {pipeline_mode = #tpu.pipeline_mode<synchronous>, transform_indices = @transform_5, window_bounds = array<i64: 8, 32>}, {pipeline_mode = #tpu.pipeline_mode<synchronous>, transform_indices = @transform_6, window_bounds = array<i64: 1, 32>}, {pipeline_mode = #tpu.pipeline_mode<synchronous>, transform_indices = @transform_7, window_bounds = array<i64: 32, 1152>}, {pipeline_mode = #tpu.pipeline_mode<synchronous>, transform_indices = @transform_8, window_bounds = array<i64: 1, 1152>}, {transform_indices = @transform_9, window_bounds = array<i64: 8, 8>}, {transform_indices = @transform_10, window_bounds = array<i64: 8, 128>}, {transform_indices = @transform_11, window_bounds = array<i64: 8, 1152>}]} {
    %c0 = arith.constant 0 : index
    %c0_0 = arith.constant 0 : index
    %0 = vector.load %arg1[%c0, %c0_0] : memref<8x560xbf16, #tpu.memory_space<vmem>>, vector<8x560xbf16>
    %c0_1 = arith.constant 0 : index
    %c0_2 = arith.constant 0 : index
    %1 = vector.load %arg2[%c0_1, %c0_2] : memref<560x32xbf16, #tpu.memory_space<vmem>>, vector<560x32xbf16>
    %cst = arith.constant dense<0.000000e+00> : vector<8x32xf32>
    %2 = tpu.matmul %0, %1, %cst {dimension_numbers = #tpu.dot_dimension_numbers<[1], [0], [0], [1], [0, 0, 1, 1], [], []>} : vector<8x560xbf16>, vector<560x32xbf16>, vector<8x32xf32> -> vector<8x32xf32>
    %c0_3 = arith.constant 0 : index
    %c0_4 = arith.constant 0 : index
    %3 = vector.load %arg3[%c0_3, %c0_4] : memref<1x32xf32, #tpu.memory_space<vmem>>, vector<1x32xf32>
    %4 = vector.broadcast %3 : vector<1x32xf32> to vector<8x32xf32>
    %5 = arith.addf %2, %4 : vector<8x32xf32>
    %6 = math.tanh %5 : vector<8x32xf32>
    %7 = arith.truncf %6 : vector<8x32xf32> to vector<8x32xbf16>
    %c0_5 = arith.constant 0 : index
    %c0_6 = arith.constant 0 : index
    %8 = vector.load %arg4[%c0_5, %c0_6] : memref<32x128xbf16, #tpu.memory_space<vmem>>, vector<32x128xbf16>
    %cst_7 = arith.constant dense<0.000000e+00> : vector<8x128xf32>
    %9 = tpu.matmul %7, %8, %cst_7 {dimension_numbers = #tpu.dot_dimension_numbers<[1], [0], [0], [1], [0, 0, 1, 1], [], []>} : vector<8x32xbf16>, vector<32x128xbf16>, vector<8x128xf32> -> vector<8x128xf32>
    %c0_8 = arith.constant 0 : index
    %c0_9 = arith.constant 0 : index
    %10 = vector.load %arg5[%c0_8, %c0_9] : memref<1x128xf32, #tpu.memory_space<vmem>>, vector<1x128xf32>
    %11 = vector.broadcast %10 : vector<1x128xf32> to vector<8x128xf32>
    %12 = arith.addf %9, %11 : vector<8x128xf32>
    %c0_10 = arith.constant 0 : index
    %c0_11 = arith.constant 0 : index
    %13 = vector.load %arg11[%c0_10, %c0_11] : memref<8x128xf32, #tpu.memory_space<vmem>>, vector<8x128xf32>
    tpu.vector_store %arg11[%c0_10, %c0_11], %12 {strides = array<i32>} : memref<8x128xf32, #tpu.memory_space<vmem>>, vector<8x128xf32>,
    %14 = vector.extract_strided_slice %12 {offsets = [0, 0], sizes = [8, 8], strides = [1, 1]} : vector<8x128xf32> to vector<8x8xf32>
    %15 = vector.extract_strided_slice %12 {offsets = [0, 8], sizes = [8, 8], strides = [1, 1]} : vector<8x128xf32> to vector<8x8xf32>
    %cst_12 = arith.constant 5.000000e-01 : f32
    %16 = vector.broadcast %cst_12 : f32 to vector<8x8xf32>
    %17 = arith.mulf %16, %15 : vector<8x8xf32>
    %18 = math.exp %17 : vector<8x8xf32>
    %c0_13 = arith.constant 0 : index
    %c0_14 = arith.constant 0 : index
    %19 = vector.load %arg10[%c0_13, %c0_14] : memref<8x8xf32, #tpu.memory_space<vmem>>, vector<8x8xf32>
    %20 = arith.mulf %18, %19 : vector<8x8xf32>
    %21 = arith.addf %14, %20 : vector<8x8xf32>
    %22 = arith.truncf %21 : vector<8x8xf32> to vector<8x8xbf16>
    %c0_15 = arith.constant 0 : index
    %c0_16 = arith.constant 0 : index
    %23 = vector.load %arg6[%c0_15, %c0_16] : memref<8x32xbf16, #tpu.memory_space<vmem>>, vector<8x32xbf16>
    %cst_17 = arith.constant dense<0.000000e+00> : vector<8x32xf32>
    %24 = tpu.matmul %22, %23, %cst_17 {dimension_numbers = #tpu.dot_dimension_numbers<[1], [0], [0], [1], [0, 0, 1, 1], [], []>} : vector<8x8xbf16>, vector<8x32xbf16>, vector<8x32xf32> -> vector<8x32xf32>
    %c0_18 = arith.constant 0 : index
    %c0_19 = arith.constant 0 : index
    %25 = vector.load %arg7[%c0_18, %c0_19] : memref<1x32xf32, #tpu.memory_space<vmem>>, vector<1x32xf32>
    %26 = vector.broadcast %25 : vector<1x32xf32> to vector<8x32xf32>
    %27 = arith.addf %24, %26 : vector<8x32xf32>
    %28 = math.tanh %27 : vector<8x32xf32>
    %29 = arith.truncf %28 : vector<8x32xf32> to vector<8x32xbf16>
    %c0_20 = arith.constant 0 : index
    %c0_21 = arith.constant 0 : index
    %30 = vector.load %arg8[%c0_20, %c0_21] : memref<32x1152xbf16, #tpu.memory_space<vmem>>, vector<32x1152xbf16>
    %cst_22 = arith.constant dense<0.000000e+00> : vector<8x1152xf32>
    %31 = tpu.matmul %29, %30, %cst_22 {dimension_numbers = #tpu.dot_dimension_numbers<[1], [0], [0], [1], [0, 0, 1, 1], [], []>} : vector<8x32xbf16>, vector<32x1152xbf16>, vector<8x1152xf32> -> vector<8x1152xf32>
    %c0_23 = arith.constant 0 : index
    %c0_24 = arith.constant 0 : index
    %32 = vector.load %arg9[%c0_23, %c0_24] : memref<1x1152xf32, #tpu.memory_space<vmem>>, vector<1x1152xf32>
    %33 = vector.broadcast %32 : vector<1x1152xf32> to vector<8x1152xf32>
    %34 = arith.addf %31, %33 : vector<8x1152xf32>
    %35 = tpu.iota {dimensions = array<i32: 1>} : vector<8x1152xi32>
    %c560_i32 = arith.constant 560 : i32
    %36 = vector.broadcast %c560_i32 : i32 to vector<8x1152xi32>
    %37 = arith.cmpi slt, %35, %36 : vector<8x1152xi32>
    %38 = arith.negf %34 : vector<8x1152xf32>
    %39 = math.exp %38 : vector<8x1152xf32>
    %cst_25 = arith.constant 1.000000e+00 : f32
    %40 = vector.broadcast %cst_25 : f32 to vector<8x1152xf32>
    %41 = arith.addf %40, %39 : vector<8x1152xf32>
    %42 = arith.divf %40, %41 : vector<8x1152xf32>
    %43 = math.tanh %34 : vector<8x1152xf32>
    %44 = arith.select %37, %42, %43 : vector<8x1152xi1>, vector<8x1152xf32>
    %c0_26 = arith.constant 0 : index
    %c0_27 = arith.constant 0 : index
    %45 = vector.load %arg12[%c0_26, %c0_27] : memref<8x1152xf32, #tpu.memory_space<vmem>>, vector<8x1152xf32>
    tpu.vector_store %arg12[%c0_26, %c0_27], %44 {strides = array<i32>} : memref<8x1152xf32, #tpu.memory_space<vmem>>, vector<8x1152xf32>,
    return
  }
  func.func @transform_0(%arg0: i32) -> (i32, i32) {
    %c0_i32 = arith.constant 0 : i32
    %c0_i32_0 = arith.constant 0 : i32
    return %arg0, %c0_i32 : i32, i32
  }
  func.func @transform_1(%arg0: i32) -> (i32, i32) {
    %c0_i32 = arith.constant 0 : i32
    %c0_i32_0 = arith.constant 0 : i32
    %c0_i32_1 = arith.constant 0 : i32
    return %c0_i32, %c0_i32_0 : i32, i32
  }
  func.func @transform_2(%arg0: i32) -> (i32, i32) {
    %c0_i32 = arith.constant 0 : i32
    %c0_i32_0 = arith.constant 0 : i32
    %c0_i32_1 = arith.constant 0 : i32
    return %c0_i32, %c0_i32_0 : i32, i32
  }
  func.func @transform_3(%arg0: i32) -> (i32, i32) {
    %c0_i32 = arith.constant 0 : i32
    %c0_i32_0 = arith.constant 0 : i32
    %c0_i32_1 = arith.constant 0 : i32
    return %c0_i32, %c0_i32_0 : i32, i32
  }
  func.func @transform_4(%arg0: i32) -> (i32, i32) {
    %c0_i32 = arith.constant 0 : i32
    %c0_i32_0 = arith.constant 0 : i32
    %c0_i32_1 = arith.constant 0 : i32
    return %c0_i32, %c0_i32_0 : i32, i32
  }
  func.func @transform_5(%arg0: i32) -> (i32, i32) {
    %c0_i32 = arith.constant 0 : i32
    %c0_i32_0 = arith.constant 0 : i32
    %c0_i32_1 = arith.constant 0 : i32
    return %c0_i32, %c0_i32_0 : i32, i32
  }
  func.func @transform_6(%arg0: i32) -> (i32, i32) {
    %c0_i32 = arith.constant 0 : i32
    %c0_i32_0 = arith.constant 0 : i32
    %c0_i32_1 = arith.constant 0 : i32
    return %c0_i32, %c0_i32_0 : i32, i32
  }
  func.func @transform_7(%arg0: i32) -> (i32, i32) {
    %c0_i32 = arith.constant 0 : i32
    %c0_i32_0 = arith.constant 0 : i32
    %c0_i32_1 = arith.constant 0 : i32
    return %c0_i32, %c0_i32_0 : i32, i32
  }
  func.func @transform_8(%arg0: i32) -> (i32, i32) {
    %c0_i32 = arith.constant 0 : i32
    %c0_i32_0 = arith.constant 0 : i32
    %c0_i32_1 = arith.constant 0 : i32
    return %c0_i32, %c0_i32_0 : i32, i32
  }
  func.func @transform_9(%arg0: i32) -> (i32, i32) {
    %c0_i32 = arith.constant 0 : i32
    %c0_i32_0 = arith.constant 0 : i32
    return %arg0, %c0_i32 : i32, i32
  }
  func.func @transform_10(%arg0: i32) -> (i32, i32) {
    %c0_i32 = arith.constant 0 : i32
    %c0_i32_0 = arith.constant 0 : i32
    return %arg0, %c0_i32 : i32, i32
  }
  func.func @transform_11(%arg0: i32) -> (i32, i32) {
    %c0_i32 = arith.constant 0 : i32
    %c0_i32_0 = arith.constant 0 : i32
    return %arg0, %c0_i32 : i32, i32
  }
}

</mosaic_0001>

<llo_original>
// kernel: tpu_custom_call.1
$region0: #{tpu_custom_call.1}
  #allocation0 [shape = 'u32[]', space=smem, size = 0x4, offset = 0x4, fixed_abs, tag = 'smem constant byte address 0x4 - core index']
  #allocation1 [shape = 'u32[144,128]{1,0:T(1,128)}', space=vmem, size = 0x12000, scoped, tag = 'internal scratch']
  %s0 = inlined_call_operand.vmem [shape: bf16[8,560], index: 0, kind: input, shape index: {}]
  %s1 = inlined_call_operand.vmem [shape: bf16[560,32], index: 1, kind: input, shape index: {}]
  %s2 = inlined_call_operand.vmem [shape: f32[1,32], index: 2, kind: input, shape index: {}]
  %s3 = inlined_call_operand.vmem [shape: bf16[32,128], index: 3, kind: input, shape index: {}]
  %s4 = inlined_call_operand.vmem [shape: f32[1,128], index: 4, kind: input, shape index: {}]
  %s5 = inlined_call_operand.vmem [shape: bf16[8,32], index: 5, kind: input, shape index: {}]
  %s6 = inlined_call_operand.vmem [shape: f32[1,32], index: 6, kind: input, shape index: {}]
  %s7 = inlined_call_operand.vmem [shape: bf16[32,1152], index: 7, kind: input, shape index: {}]
  %s8 = inlined_call_operand.vmem [shape: f32[1,1152], index: 8, kind: input, shape index: {}]
  %s9 = inlined_call_operand.vmem [shape: f32[8,8], index: 9, kind: input, shape index: {}]
  %s10 = inlined_call_operand.hbm [shape: f32[8,128], index: 10, kind: output, shape index: {0}]
  %s11 = inlined_call_operand.hbm [shape: f32[8,1152], index: 11, kind: output, shape index: {1}]
  %12 = xla_tuple %s10, %s11
  %s13 = sld [smem:[#allocation0]]
  $region58: #{tpu_custom_call.1} parent=0
    _
  %s15 = ssub.s32 1, %s13
  %s16 = scalar_select 0, %s15, %s13
  $region1: #{tpu_custom_call.1} parent=0
    #allocation2 [shape = 'u8[4096]{0}', space=vmem, size = 0x1000, scoped, tag = 'output window, operand 0, single buffered']
    #allocation3 [shape = 's32[1]{0}', space=sflag, size = 0x4, scoped, tag = 'scoped memory for tpu_custom_call.1']
    #allocation4 [shape = 'u8[36864]{0}', space=vmem, size = 0x9000, scoped, tag = 'output window, operand 1, single buffered']
    #allocation5 [shape = 's32[1]{0}', space=sflag, size = 0x4, scoped, tag = 'scoped memory for tpu_custom_call.1']
    %17 = vsyncpa [#allocation3], 0
    %18 = vsyncpa [#allocation5], 0
    // Predicated region
    $region2: #{tpu_custom_call.1} parent=1 // pred_check
      _
    $region3: #{tpu_custom_call.1} parent=1 // pred_check_branch
      %20 = sbr.rel (0) target = $region5
    $region4: #{tpu_custom_call.1} parent=1 // pred_region
      _
    $region5: #{tpu_custom_call.1} parent=1 // pred_fallthru
      _
    // Predicated region
    $region6: #{tpu_custom_call.1} parent=1 // pred_check
      _
    $region7: #{tpu_custom_call.1} parent=1 // pred_check_branch
      %22 = sbr.rel (0) target = $region9
    $region8: #{tpu_custom_call.1} parent=1 // pred_region
      _
    $region9: #{tpu_custom_call.1} parent=1 // pred_fallthru
      _
    // Predicated region
    $region10: #{tpu_custom_call.1} parent=1 // pred_check
      _
    $region11: #{tpu_custom_call.1} parent=1 // pred_check_branch
      %24 = sbr.rel (0) target = $region13
    $region12: #{tpu_custom_call.1} parent=1 // pred_region
      _
    $region13: #{tpu_custom_call.1} parent=1 // pred_fallthru
      _
    // Predicated region
    $region14: #{tpu_custom_call.1} parent=1 // pred_check
      _
    $region15: #{tpu_custom_call.1} parent=1 // pred_check_branch
      %26 = sbr.rel (0) target = $region17
    $region16: #{tpu_custom_call.1} parent=1 // pred_region
      _
    $region17: #{tpu_custom_call.1} parent=1 // pred_fallthru
      _
    // Predicated region
    $region18: #{tpu_custom_call.1} parent=1 // pred_check
      _
    $region19: #{tpu_custom_call.1} parent=1 // pred_check_branch
      %28 = sbr.rel (0) target = $region21
    $region20: #{tpu_custom_call.1} parent=1 // pred_region
      _
    $region21: #{tpu_custom_call.1} parent=1 // pred_fallthru
      _
    // Predicated region
    $region22: #{tpu_custom_call.1} parent=1 // pred_check
      _
    $region23: #{tpu_custom_call.1} parent=1 // pred_check_branch
      %30 = sbr.rel (0) target = $region25
    $region24: #{tpu_custom_call.1} parent=1 // pred_region
      _
    $region25: #{tpu_custom_call.1} parent=1 // pred_fallthru
      _
    // Predicated region
    $region26: #{tpu_custom_call.1} parent=1 // pred_check
      _
    $region27: #{tpu_custom_call.1} parent=1 // pred_check_branch
      %32 = sbr.rel (0) target = $region29
    $region28: #{tpu_custom_call.1} parent=1 // pred_region
      _
    $region29: #{tpu_custom_call.1} parent=1 // pred_fallthru
      _
    // Predicated region
    $region30: #{tpu_custom_call.1} parent=1 // pred_check
      _
    $region31: #{tpu_custom_call.1} parent=1 // pred_check_branch
      %34 = sbr.rel (0) target = $region33
    $region32: #{tpu_custom_call.1} parent=1 // pred_region
      _
    $region33: #{tpu_custom_call.1} parent=1 // pred_fallthru
      _
    // Predicated region
    $region34: #{tpu_custom_call.1} parent=1 // pred_check
      _
    $region35: #{tpu_custom_call.1} parent=1 // pred_check_branch
      %36 = sbr.rel (0) target = $region37
    $region36: #{tpu_custom_call.1} parent=1 // pred_region
      _
    $region37: #{tpu_custom_call.1} parent=1 // pred_fallthru
      _
    // Predicated region
    $region38: #{tpu_custom_call.1} parent=1 // pred_check
      _
    $region39: #{tpu_custom_call.1} parent=1 // pred_check_branch
      %38 = sbr.rel (0) target = $region41
    $region40: #{tpu_custom_call.1} parent=1 // pred_region
      _
    $region41: #{tpu_custom_call.1} parent=1 // pred_fallthru
      _
    %v40 = vld [vmem:[%s0] sm:$0xff]
    %v41 = vld [vmem:[%s0 + $0x8] sm:$0xff]
    %v42 = vld [vmem:[%s0 + $0x10] sm:$0xf]
    %v43 = vld [vmem:[%s1] sm:$0xf]
    %v44 = vld [vmem:[%s1 + $0x4] sm:$0xf]
    %v45 = vld [vmem:[%s1 + $0x8] sm:$0xf]
    %v46 = vld [vmem:[%s1 + $0xc] sm:$0xf]
    %v47 = vld [vmem:[%s1 + $0x10] sm:$0xf]
    %v48 = vld [vmem:[%s1 + $0x14] sm:$0xf]
    %v49 = vld [vmem:[%s1 + $0x18] sm:$0xf]
    %v50 = vld [vmem:[%s1 + $0x1c] sm:$0xf]
    %v51 = vld [vmem:[%s1 + $0x20] sm:$0xf]
    %v52 = vld [vmem:[%s1 + $0x24] sm:$0xf]
    %v53 = vld [vmem:[%s1 + $0x28] sm:$0xf]
    %v54 = vld [vmem:[%s1 + $0x2c] sm:$0xf]
    %v55 = vld [vmem:[%s1 + $0x30] sm:$0xf]
    %v56 = vld [vmem:[%s1 + $0x34] sm:$0xf]
    %v57 = vld [vmem:[%s1 + $0x38] sm:$0xf]
    %v58 = vld [vmem:[%s1 + $0x3c] sm:$0xf]
    %v59 = vld [vmem:[%s1 + $0x40] sm:$0xf]
    %v60 = vld [vmem:[%s1 + $0x44] sm:$0xf]
    %v61 = vld [vmem:[%s1 + $0x48] sm:$0xf]
    %v62 = vld [vmem:[%s1 + $0x4c] sm:$0xf]
    %v63 = vld [vmem:[%s1 + $0x50] sm:$0xf]
    %v64 = vld [vmem:[%s1 + $0x54] sm:$0xf]
    %v65 = vld [vmem:[%s1 + $0x58] sm:$0xf]
    %v66 = vld [vmem:[%s1 + $0x5c] sm:$0xf]
    %v67 = vld [vmem:[%s1 + $0x60] sm:$0xf]
    %v68 = vld [vmem:[%s1 + $0x64] sm:$0xf]
    %v69 = vld [vmem:[%s1 + $0x68] sm:$0xf]
    %v70 = vld [vmem:[%s1 + $0x6c] sm:$0xf]
    %v71 = vld [vmem:[%s1 + $0x70] sm:$0xf]
    %v72 = vld [vmem:[%s1 + $0x74] sm:$0xf]
    %v73 = vld [vmem:[%s1 + $0x78] sm:$0xf]
    %v74 = vld [vmem:[%s1 + $0x7c] sm:$0xf]
    %v75 = vld [vmem:[%s1 + $0x80] sm:$0xf]
    %v76 = vld [vmem:[%s1 + $0x84] sm:$0xf]
    %v77 = vld [vmem:[%s1 + $0x88] sm:$0xf]
    %v78 = vld [vmem:[%s1 + $0x8c] sm:$0xf]
    %v79 = vld [vmem:[%s1 + $0x90] sm:$0xf]
    %v80 = vld [vmem:[%s1 + $0x94] sm:$0xf]
    %v81 = vld [vmem:[%s1 + $0x98] sm:$0xf]
    %v82 = vld [vmem:[%s1 + $0x9c] sm:$0xf]
    %v83 = vld [vmem:[%s1 + $0xa0] sm:$0xf]
    %v84 = vld [vmem:[%s1 + $0xa4] sm:$0xf]
    %v85 = vld [vmem:[%s1 + $0xa8] sm:$0xf]
    %v86 = vld [vmem:[%s1 + $0xac] sm:$0xf]
    %v87 = vld [vmem:[%s1 + $0xb0] sm:$0xf]
    %v88 = vld [vmem:[%s1 + $0xb4] sm:$0xf]
    %v89 = vld [vmem:[%s1 + $0xb8] sm:$0xf]
    %v90 = vld [vmem:[%s1 + $0xbc] sm:$0xf]
    %v91 = vld [vmem:[%s1 + $0xc0] sm:$0xf]
    %v92 = vld [vmem:[%s1 + $0xc4] sm:$0xf]
    %v93 = vld [vmem:[%s1 + $0xc8] sm:$0xf]
    %v94 = vld [vmem:[%s1 + $0xcc] sm:$0xf]
    %v95 = vld [vmem:[%s1 + $0xd0] sm:$0xf]
    %v96 = vld [vmem:[%s1 + $0xd4] sm:$0xf]
    %v97 = vld [vmem:[%s1 + $0xd8] sm:$0xf]
    %v98 = vld [vmem:[%s1 + $0xdc] sm:$0xf]
    %v99 = vld [vmem:[%s1 + $0xe0] sm:$0xf]
    %v100 = vld [vmem:[%s1 + $0xe4] sm:$0xf]
    %v101 = vld [vmem:[%s1 + $0xe8] sm:$0xf]
    %v102 = vld [vmem:[%s1 + $0xec] sm:$0xf]
    %v103 = vld [vmem:[%s1 + $0xf0] sm:$0xf]
    %v104 = vld [vmem:[%s1 + $0xf4] sm:$0xf]
    %v105 = vld [vmem:[%s1 + $0xf8] sm:$0xf]
    %v106 = vld [vmem:[%s1 + $0xfc] sm:$0xf]
    %v107 = vld [vmem:[%s1 + $0x100] sm:$0xf]
    %v108 = vld [vmem:[%s1 + $0x104] sm:$0xf]
    %v109 = vld [vmem:[%s1 + $0x108] sm:$0xf]
    %v110 = vld [vmem:[%s1 + $0x10c] sm:$0xf]
    %v111 = vld [vmem:[%s1 + $0x110] sm:$0xf]
    %v112 = vld [vmem:[%s1 + $0x114] sm:$0xf]
    %v113 = vld [vmem:[%s2] sm:$0x1]
    %v115 = vlaneseq
    %v116 = vshrl.u32 %v115, 7
    %v117 = vsub.s32 0, %v116
    %v118 = vrot.slane %v113, %v117
    %v123 = vunpack.c.l.b16 %v40
    %v124 = vunpack.c.h.b16 %v40
    %v125 = vunpack.c.l.b16 %v41
    %v126 = vunpack.c.h.b16 %v41
    %v127 = vunpack.c.l.b16 %v42
    %v128 = vpack.c.b16 %v123, %v123
    %v129 = vpack.c.b16 %v124, %v124
    %v130 = vpack.c.b16 %v125, %v125
    %v131 = vpack.c.b16 %v126, %v126
    %v132 = vpack.c.b16 %v127, %v127
    %v207 = vunpack.c.l.b16 %v43
    %v208 = vunpack.c.l.b16 %v44
    %v209 = vunpack.c.l.b16 %v45
    %v210 = vunpack.c.l.b16 %v46
    %v211 = vunpack.c.l.b16 %v47
    %v212 = vunpack.c.l.b16 %v48
    %v213 = vunpack.c.l.b16 %v49
    %v214 = vunpack.c.l.b16 %v50
    %v215 = vunpack.c.l.b16 %v51
    %v216 = vunpack.c.l.b16 %v52
    %v217 = vunpack.c.l.b16 %v53
    %v218 = vunpack.c.l.b16 %v54
    %v219 = vunpack.c.l.b16 %v55
    %v220 = vunpack.c.l.b16 %v56
    %v221 = vunpack.c.l.b16 %v57
    %v222 = vunpack.c.l.b16 %v58
    %v223 = vunpack.c.l.b16 %v59
    %v224 = vunpack.c.l.b16 %v60
    %v225 = vunpack.c.l.b16 %v61
    %v226 = vunpack.c.l.b16 %v62
    %v227 = vunpack.c.l.b16 %v63
    %v228 = vunpack.c.l.b16 %v64
    %v229 = vunpack.c.l.b16 %v65
    %v230 = vunpack.c.l.b16 %v66
    %v231 = vunpack.c.l.b16 %v67
    %v232 = vunpack.c.l.b16 %v68
    %v233 = vunpack.c.l.b16 %v69
    %v234 = vunpack.c.l.b16 %v70
    %v235 = vunpack.c.l.b16 %v71
    %v236 = vunpack.c.l.b16 %v72
    %v237 = vunpack.c.l.b16 %v73
    %v238 = vunpack.c.l.b16 %v74
    %v239 = vunpack.c.l.b16 %v75
    %v240 = vunpack.c.l.b16 %v76
    %v241 = vunpack.c.l.b16 %v77
    %v242 = vunpack.c.l.b16 %v78
    %v243 = vunpack.c.l.b16 %v79
    %v244 = vunpack.c.l.b16 %v80
    %v245 = vunpack.c.l.b16 %v81
    %v246 = vunpack.c.l.b16 %v82
    %v247 = vunpack.c.l.b16 %v83
    %v248 = vunpack.c.l.b16 %v84
    %v249 = vunpack.c.l.b16 %v85
    %v250 = vunpack.c.l.b16 %v86
    %v251 = vunpack.c.l.b16 %v87
    %v252 = vunpack.c.l.b16 %v88
    %v253 = vunpack.c.l.b16 %v89
    %v254 = vunpack.c.l.b16 %v90
    %v255 = vunpack.c.l.b16 %v91
    %v256 = vunpack.c.l.b16 %v92
    %v257 = vunpack.c.l.b16 %v93
    %v258 = vunpack.c.l.b16 %v94
    %v259 = vunpack.c.l.b16 %v95
    %v260 = vunpack.c.l.b16 %v96
    %v261 = vunpack.c.l.b16 %v97
    %v262 = vunpack.c.l.b16 %v98
    %v263 = vunpack.c.l.b16 %v99
    %v264 = vunpack.c.l.b16 %v100
    %v265 = vunpack.c.l.b16 %v101
    %v266 = vunpack.c.l.b16 %v102
    %v267 = vunpack.c.l.b16 %v103
    %v268 = vunpack.c.l.b16 %v104
    %v269 = vunpack.c.l.b16 %v105
    %v270 = vunpack.c.l.b16 %v106
    %v271 = vunpack.c.l.b16 %v107
    %v272 = vunpack.c.l.b16 %v108
    %v273 = vunpack.c.l.b16 %v109
    %v274 = vunpack.c.l.b16 %v110
    %v275 = vunpack.c.l.b16 %v111
    %v276 = vunpack.c.l.b16 %v112
    %v277 = vpack.c.b16 %v208, %v207
    %v278 = vpack.c.b16 %v210, %v209
    %v279 = vpack.c.b16 %v212, %v211
    %v280 = vpack.c.b16 %v214, %v213
    %v281 = vpack.c.b16 %v216, %v215
    %v282 = vpack.c.b16 %v218, %v217
    %v283 = vpack.c.b16 %v220, %v219
    %v284 = vpack.c.b16 %v222, %v221
    %v285 = vpack.c.b16 %v224, %v223
    %v286 = vpack.c.b16 %v226, %v225
    %v287 = vpack.c.b16 %v228, %v227
    %v288 = vpack.c.b16 %v230, %v229
    %v289 = vpack.c.b16 %v232, %v231
    %v290 = vpack.c.b16 %v234, %v233
    %v291 = vpack.c.b16 %v236, %v235
    %v292 = vpack.c.b16 %v238, %v237
    %v293 = vpack.c.b16 %v240, %v239
    %v294 = vpack.c.b16 %v242, %v241
    %v295 = vpack.c.b16 %v244, %v243
    %v296 = vpack.c.b16 %v246, %v245
    %v297 = vpack.c.b16 %v248, %v247
    %v298 = vpack.c.b16 %v250, %v249
    %v299 = vpack.c.b16 %v252, %v251
    %v300 = vpack.c.b16 %v254, %v253
    %v301 = vpack.c.b16 %v256, %v255
    %v302 = vpack.c.b16 %v258, %v257
    %v303 = vpack.c.b16 %v260, %v259
    %v304 = vpack.c.b16 %v262, %v261
    %v305 = vpack.c.b16 %v264, %v263
    %v306 = vpack.c.b16 %v266, %v265
    %v307 = vpack.c.b16 %v268, %v267
    %v308 = vpack.c.b16 %v270, %v269
    %v309 = vpack.c.b16 %v272, %v271
    %v310 = vpack.c.b16 %v274, %v273
    %v311 = vpack.c.b16 %v276, %v275
    %vm347 = vcmask 392192
    %v349 = vsel %vm347, %v132, 0
    %351 = vmatprep.subr.bf16.mxu0 0
    %352 = vmatpush1.bf16.msra.mxu0 %v284
    %353 = vmatprep.subr.bf16.mxu0 0
    %354 = vmatpush1.bf16.msra.mxu0 %v283
    %355 = vmatprep.subr.bf16.mxu0 0
    %356 = vmatpush1.bf16.msra.mxu0 %v282
    %357 = vmatprep.subr.bf16.mxu0 0
    %358 = vmatpush1.bf16.msra.mxu0 %v281
    %359 = vmatprep.subr.bf16.mxu0 0
    %360 = vmatpush1.bf16.msra.mxu0 %v280
    %361 = vmatprep.subr.bf16.mxu0 0
    %362 = vmatpush1.bf16.msra.mxu0 %v279
    %363 = vmatprep.subr.bf16.mxu0 0
    %364 = vmatpush1.bf16.msra.mxu0 %v278
    %365 = vmatprep.subr.bf16.mxu0 0
    %366 = vmatpush1.bf16.msra.mxu0 %v277
    %367 = vmatprep.subr.bf16.mxu0 0
    %368 = vmatpush2.bf16.msra.mxu0 %v292
    %369 = vmatprep.subr.bf16.mxu0 0
    %370 = vmatpush2.bf16.msra.mxu0 %v291
    %371 = vmatprep.subr.bf16.mxu0 0
    %372 = vmatpush2.bf16.msra.mxu0 %v290
    %373 = vmatprep.subr.bf16.mxu0 0
    %374 = vmatpush2.bf16.msra.mxu0 %v289
    %375 = vmatprep.subr.bf16.mxu0 0
    %376 = vmatpush2.bf16.msra.mxu0 %v288
    %377 = vmatprep.subr.bf16.mxu0 0
    %378 = vmatpush2.bf16.msra.mxu0 %v287
    %379 = vmatprep.subr.bf16.mxu0 0
    %380 = vmatpush2.bf16.msra.mxu0 %v286
    %381 = vmatprep.subr.bf16.mxu0 0
    %382 = vmatpush2.bf16.msra.mxu0 %v285
    %383 = vmatprep.mubr.bf16.mxu0 %v129
    %384 = vmatmul.mubr.bf16.gmra.mxu0 %v128
    %v385 = vpop.f32.mrf.mxu0
    %v386 = vadd.f32 %v118, %v385
    %v387 = vpop.f32.mrf.mxu0
    %v388 = vpop.f32.mrf.mxu0
    %v389 = vpop.f32.mrf.mxu0
    %390 = vdwg.mxu0
    %391 = vmatprep.subr.bf16.mxu0 0
    %392 = vmatpush1.bf16.msra.mxu0 %v300
    %393 = vmatprep.subr.bf16.mxu0 0
    %394 = vmatpush1.bf16.msra.mxu0 %v299
    %395 = vmatprep.subr.bf16.mxu0 0
    %396 = vmatpush1.bf16.msra.mxu0 %v298
    %397 = vmatprep.subr.bf16.mxu0 0
    %398 = vmatpush1.bf16.msra.mxu0 %v297
    %399 = vmatprep.subr.bf16.mxu0 0
    %400 = vmatpush1.bf16.msra.mxu0 %v296
    %401 = vmatprep.subr.bf16.mxu0 0
    %402 = vmatpush1.bf16.msra.mxu0 %v295
    %403 = vmatprep.subr.bf16.mxu0 0
    %404 = vmatpush1.bf16.msra.mxu0 %v294
    %405 = vmatprep.subr.bf16.mxu0 0
    %406 = vmatpush1.bf16.msra.mxu0 %v293
    %407 = vmatprep.subr.bf16.mxu0 0
    %408 = vmatpush2.bf16.msra.mxu0 %v308
    %409 = vmatprep.subr.bf16.mxu0 0
    %410 = vmatpush2.bf16.msra.mxu0 %v307
    %411 = vmatprep.subr.bf16.mxu0 0
    %412 = vmatpush2.bf16.msra.mxu0 %v306
    %413 = vmatprep.subr.bf16.mxu0 0
    %414 = vmatpush2.bf16.msra.mxu0 %v305
    %415 = vmatprep.subr.bf16.mxu0 0
    %416 = vmatpush2.bf16.msra.mxu0 %v304
    %417 = vmatprep.subr.bf16.mxu0 0
    %418 = vmatpush2.bf16.msra.mxu0 %v303
    %419 = vmatprep.subr.bf16.mxu0 0
    %420 = vmatpush2.bf16.msra.mxu0 %v302
    %421 = vmatprep.subr.bf16.mxu0 0
    %422 = vmatpush2.bf16.msra.mxu0 %v301
    %423 = vmatprep.mubr.bf16.mxu0 %v131
    %424 = vmatmul.mubr.bf16.gmra.mxu0 %v130
    %v425 = vpop.f32.mrf.mxu0
    %v426 = vadd.f32 %v386, %v425
    %v427 = vpop.f32.mrf.mxu0
    %v428 = vpop.f32.mrf.mxu0
    %v429 = vpop.f32.mrf.mxu0
    %430 = vdwg.mxu0
    %431 = vmatprep.subr.bf16.mxu0 0
    %432 = vmatpush1.bf16.msra.mxu0 0
    %433 = vmatprep.subr.bf16.mxu0 0
    %434 = vmatpush1.bf16.msra.mxu0 0
    %435 = vmatprep.subr.bf16.mxu0 0
    %436 = vmatpush1.bf16.msra.mxu0 0
    %437 = vmatprep.subr.bf16.mxu0 0
    %438 = vmatpush1.bf16.msra.mxu0 0
    %439 = vmatprep.subr.bf16.mxu0 0
    %440 = vmatpush1.bf16.msra.mxu0 0
    %441 = vmatprep.subr.bf16.mxu0 0
    %442 = vmatpush1.bf16.msra.mxu0 %v311
    %443 = vmatprep.subr.bf16.mxu0 0
    %444 = vmatpush1.bf16.msra.mxu0 %v310
    %445 = vmatprep.subr.bf16.mxu0 0
    %446 = vmatpush1.bf16.msra.mxu0 %v309
    %447 = vmatprep.subr.bf16.mxu0 0
    %448 = vmatpush2.bf16.msra.mxu0 0
    %449 = vmatprep.subr.bf16.mxu0 0
    %450 = vmatpush2.bf16.msra.mxu0 0
    %451 = vmatprep.subr.bf16.mxu0 0
    %452 = vmatpush2.bf16.msra.mxu0 0
    %453 = vmatprep.subr.bf16.mxu0 0
    %454 = vmatpush2.bf16.msra.mxu0 0
    %455 = vmatprep.subr.bf16.mxu0 0
    %456 = vmatpush2.bf16.msra.mxu0 0
    %457 = vmatprep.subr.bf16.mxu0 0
    %458 = vmatpush2.bf16.msra.mxu0 0
    %459 = vmatprep.subr.bf16.mxu0 0
    %460 = vmatpush2.bf16.msra.mxu0 0
    %461 = vmatprep.subr.bf16.mxu0 0
    %462 = vmatpush2.bf16.msra.mxu0 0
    %463 = vmatprep.mubr.bf16.mxu0 0
    %464 = vmatmul.mubr.bf16.gmra.mxu0 %v349
    %v465 = vpop.f32.mrf.mxu0
    %v466 = vadd.f32 %v426, %v465
    %v467 = vpop.f32.mrf.mxu0
    %v468 = vpop.f32.mrf.mxu0
    %v469 = vpop.f32.mrf.mxu0
    %470 = vdwg.mxu0
    %v471 = vtanh.pop %v466
    %v472 = vpack.c.bf16 %v471, %v471
    %v473 = vld [vmem:[%s3] sm:$0xf]
    %v474 = vld [vmem:[%s3 + $0x4] sm:$0xf]
    %v475 = vld [vmem:[%s3 + $0x8] sm:$0xf]
    %v476 = vld [vmem:[%s3 + $0xc] sm:$0xf]
    %v477 = vld [vmem:[%s4] sm:$0x1]
    %v479 = vlaneseq
    %v480 = vshrl.u32 %v479, 7
    %v481 = vsub.s32 0, %v480
    %v482 = vrot.slane %v477, %v481
    %v488 = vunpack.c.l.b16 %v473
    %v489 = vunpack.c.l.b16 %v474
    %v490 = vunpack.c.l.b16 %v475
    %v491 = vunpack.c.l.b16 %v476
    %v492 = vpack.c.b16 %v489, %v488
    %v493 = vpack.c.b16 %v491, %v490
    %vm496 = vcmask 261120
    %v498 = vsel %vm496, %v472, 0
    %500 = vmatprep.subr.bf16.mxu0 0
    %501 = vmatpush1.bf16.msra.mxu0 0
    %502 = vmatprep.subr.bf16.mxu0 0
    %503 = vmatpush1.bf16.msra.mxu0 0
    %504 = vmatprep.subr.bf16.mxu0 0
    %505 = vmatpush1.bf16.msra.mxu0 0
    %506 = vmatprep.subr.bf16.mxu0 0
    %507 = vmatpush1.bf16.msra.mxu0 0
    %508 = vmatprep.subr.bf16.mxu0 0
    %509 = vmatpush1.bf16.msra.mxu0 0
    %510 = vmatprep.subr.bf16.mxu0 0
    %511 = vmatpush1.bf16.msra.mxu0 0
    %512 = vmatprep.subr.bf16.mxu0 0
    %513 = vmatpush1.bf16.msra.mxu0 %v493
    %514 = vmatprep.subr.bf16.mxu0 0
    %515 = vmatpush1.bf16.msra.mxu0 %v492
    %516 = vmatprep.subr.bf16.mxu0 0
    %517 = vmatpush2.bf16.msra.mxu0 0
    %518 = vmatprep.subr.bf16.mxu0 0
    %519 = vmatpush2.bf16.msra.mxu0 0
    %520 = vmatprep.subr.bf16.mxu0 0
    %521 = vmatpush2.bf16.msra.mxu0 0
    %522 = vmatprep.subr.bf16.mxu0 0
    %523 = vmatpush2.bf16.msra.mxu0 0
    %524 = vmatprep.subr.bf16.mxu0 0
    %525 = vmatpush2.bf16.msra.mxu0 0
    %526 = vmatprep.subr.bf16.mxu0 0
    %527 = vmatpush2.bf16.msra.mxu0 0
    %528 = vmatprep.subr.bf16.mxu0 0
    %529 = vmatpush2.bf16.msra.mxu0 0
    %530 = vmatprep.subr.bf16.mxu0 0
    %531 = vmatpush2.bf16.msra.mxu0 0
    %532 = vmatprep.mubr.bf16.mxu0 0
    %533 = vmatmul.mubr.bf16.gmra.mxu0 %v498
    %v534 = vpop.f32.mrf.mxu0
    %v535 = vadd.f32 %v482, %v534
    %v536 = vpop.f32.mrf.mxu0
    %v537 = vpop.f32.mrf.mxu0
    %v538 = vpop.f32.mrf.mxu0
    %539 = vdwg.mxu0
    %540 = vst [vmem:[#allocation2] sm:$0xff] %v535
    %v541 = vmul.f32 %v535, 0.5
    %v542 = vmul.f32 %v541, 1.442695
    %v543 = vpow.pop %v542
    %v544 = vld [vmem:[%s9] sm:$0xff]
    %546 = vrot.lane.b32.xlu0 %v544, 8
    %v547 = vpop.permute.xlu0 %546
    %v549 = vmul.f32 %v543, %v547
    %551 = vrot.lane.b32.xlu0 %v549, 120
    %v552 = vpop.permute.xlu0 %551
    %v554 = vadd.f32 %v535, %v552
    %v555 = vpack.c.bf16 %v554, %v554
    %v556 = vld [vmem:[%s5] sm:$0xf]
    %v557 = vld [vmem:[%s6] sm:$0x1]
    %v559 = vlaneseq
    %v560 = vshrl.u32 %v559, 7
    %v561 = vsub.s32 0, %v560
    %v562 = vrot.slane %v557, %v561
    %vm564 = vcmask 64512
    %v566 = vsel %vm564, %v555, 0
    %vm568 = vcmask 1043456
    %v570 = vsel %vm568, %v556, 0
    %572 = vmatprep.subr.bf16.mxu0 0
    %573 = vmatpush1.bf16.msra.mxu0 0
    %574 = vmatprep.subr.bf16.mxu0 0
    %575 = vmatpush1.bf16.msra.mxu0 0
    %576 = vmatprep.subr.bf16.mxu0 0
    %577 = vmatpush1.bf16.msra.mxu0 0
    %578 = vmatprep.subr.bf16.mxu0 0
    %579 = vmatpush1.bf16.msra.mxu0 0
    %580 = vmatprep.subr.bf16.mxu0 0
    %581 = vmatpush1.bf16.msra.mxu0 0
    %582 = vmatprep.subr.bf16.mxu0 0
    %583 = vmatpush1.bf16.msra.mxu0 0
    %584 = vmatprep.subr.bf16.mxu0 0
    %585 = vmatpush1.bf16.msra.mxu0 0
    %586 = vmatprep.subr.bf16.mxu0 0
    %587 = vmatpush1.bf16.msra.mxu0 %v570
    %588 = vmatprep.subr.bf16.mxu0 0
    %589 = vmatpush2.bf16.msra.mxu0 0
    %590 = vmatprep.subr.bf16.mxu0 0
    %591 = vmatpush2.bf16.msra.mxu0 0
    %592 = vmatprep.subr.bf16.mxu0 0
    %593 = vmatpush2.bf16.msra.mxu0 0
    %594 = vmatprep.subr.bf16.mxu0 0
    %595 = vmatpush2.bf16.msra.mxu0 0
    %596 = vmatprep.subr.bf16.mxu0 0
    %597 = vmatpush2.bf16.msra.mxu0 0
    %598 = vmatprep.subr.bf16.mxu0 0
    %599 = vmatpush2.bf16.msra.mxu0 0
    %600 = vmatprep.subr.bf16.mxu0 0
    %601 = vmatpush2.bf16.msra.mxu0 0
    %602 = vmatprep.subr.bf16.mxu0 0
    %603 = vmatpush2.bf16.msra.mxu0 0
    %604 = vmatprep.mubr.bf16.mxu0 0
    %605 = vmatmul.mubr.bf16.gmra.mxu0 %v566
    %v606 = vpop.f32.mrf.mxu0
    %v607 = vadd.f32 %v562, %v606
    %v608 = vpop.f32.mrf.mxu0
    %v609 = vpop.f32.mrf.mxu0
    %v610 = vpop.f32.mrf.mxu0
    %611 = vdwg.mxu0
    %v612 = vtanh.pop %v607
    %v613 = vpack.c.bf16 %v612, %v612
    %v614 = vld [vmem:[%s7] sm:$0xff]
    %v615 = vld [vmem:[%s7 + $0x8] sm:$0xff]
    %v616 = vld [vmem:[%s7 + $0x10] sm:$0xff]
    %v617 = vld [vmem:[%s7 + $0x18] sm:$0xff]
    %v618 = vld [vmem:[%s7 + $0x20] sm:$0xf]
    %v619 = vld [vmem:[%s7 + $0x24] sm:$0xff]
    %v620 = vld [vmem:[%s7 + $0x2c] sm:$0xff]
    %v621 = vld [vmem:[%s7 + $0x34] sm:$0xff]
    %v622 = vld [vmem:[%s7 + $0x3c] sm:$0xff]
    %v623 = vld [vmem:[%s7 + $0x44] sm:$0xf]
    %v624 = vld [vmem:[%s7 + $0x48] sm:$0xff]
    %v625 = vld [vmem:[%s7 + $0x50] sm:$0xff]
    %v626 = vld [vmem:[%s7 + $0x58] sm:$0xff]
    %v627 = vld [vmem:[%s7 + $0x60] sm:$0xff]
    %v628 = vld [vmem:[%s7 + $0x68] sm:$0xf]
    %v629 = vld [vmem:[%s7 + $0x6c] sm:$0xff]
    %v630 = vld [vmem:[%s7 + $0x74] sm:$0xff]
    %v631 = vld [vmem:[%s7 + $0x7c] sm:$0xff]
    %v632 = vld [vmem:[%s7 + $0x84] sm:$0xff]
    %v633 = vld [vmem:[%s7 + $0x8c] sm:$0xf]
    %v634 = vld [vmem:[%s8] sm:$0xff]
    %v635 = vld [vmem:[%s8 + $0x8] sm:$0x1]
    %v638 = vlaneseq
    %v639 = vshrl.u32 %v638, 7
    %v640 = vsub.s32 0, %v639
    %v641 = vrot.slane %v634, %v640
    %v642 = vlaneseq
    %v643 = vshrl.u32 %v642, 7
    %v644 = vsub.s32 1, %v643
    %v645 = vrot.slane %v634, %v644
    %v646 = vlaneseq
    %v647 = vshrl.u32 %v646, 7
    %v648 = vsub.s32 2, %v647
    %v649 = vrot.slane %v634, %v648
    %v650 = vlaneseq
    %v651 = vshrl.u32 %v650, 7
    %v652 = vsub.s32 3, %v651
    %v653 = vrot.slane %v634, %v652
    %v654 = vlaneseq
    %v655 = vshrl.u32 %v654, 7
    %v656 = vsub.s32 4, %v655
    %v657 = vrot.slane %v634, %v656
    %v658 = vlaneseq
    %v659 = vshrl.u32 %v658, 7
    %v660 = vsub.s32 5, %v659
    %v661 = vrot.slane %v634, %v660
    %v662 = vlaneseq
    %v663 = vshrl.u32 %v662, 7
    %v664 = vsub.s32 6, %v663
    %v665 = vrot.slane %v634, %v664
    %v666 = vlaneseq
    %v667 = vshrl.u32 %v666, 7
    %v668 = vsub.s32 7, %v667
    %v669 = vrot.slane %v634, %v668
    %v670 = vlaneseq
    %v671 = vshrl.u32 %v670, 7
    %v672 = vsub.s32 0, %v671
    %v673 = vrot.slane %v635, %v672
    %v703 = vunpack.c.l.b16 %v614
    %v704 = vunpack.c.h.b16 %v614
    %v705 = vunpack.c.l.b16 %v615
    %v706 = vunpack.c.h.b16 %v615
    %v707 = vunpack.c.l.b16 %v616
    %v708 = vunpack.c.h.b16 %v616
    %v709 = vunpack.c.l.b16 %v617
    %v710 = vunpack.c.h.b16 %v617
    %v711 = vunpack.c.l.b16 %v618
    %v712 = vunpack.c.l.b16 %v619
    %v713 = vunpack.c.h.b16 %v619
    %v714 = vunpack.c.l.b16 %v620
    %v715 = vunpack.c.h.b16 %v620
    %v716 = vunpack.c.l.b16 %v621
    %v717 = vunpack.c.h.b16 %v621
    %v718 = vunpack.c.l.b16 %v622
    %v719 = vunpack.c.h.b16 %v622
    %v720 = vunpack.c.l.b16 %v623
    %v721 = vunpack.c.l.b16 %v624
    %v722 = vunpack.c.h.b16 %v624
    %v723 = vunpack.c.l.b16 %v625
    %v724 = vunpack.c.h.b16 %v625
    %v725 = vunpack.c.l.b16 %v626
    %v726 = vunpack.c.h.b16 %v626
    %v727 = vunpack.c.l.b16 %v627
    %v728 = vunpack.c.h.b16 %v627
    %v729 = vunpack.c.l.b16 %v628
    %v730 = vunpack.c.l.b16 %v629
    %v731 = vunpack.c.h.b16 %v629
    %v732 = vunpack.c.l.b16 %v630
    %v733 = vunpack.c.h.b16 %v630
    %v734 = vunpack.c.l.b16 %v631
    %v735 = vunpack.c.h.b16 %v631
    %v736 = vunpack.c.l.b16 %v632
    %v737 = vunpack.c.h.b16 %v632
    %v738 = vunpack.c.l.b16 %v633
    %v739 = vpack.c.b16 %v712, %v703
    %v740 = vpack.c.b16 %v713, %v704
    %v741 = vpack.c.b16 %v714, %v705
    %v742 = vpack.c.b16 %v715, %v706
    %v743 = vpack.c.b16 %v716, %v707
    %v744 = vpack.c.b16 %v717, %v708
    %v745 = vpack.c.b16 %v718, %v709
    %v746 = vpack.c.b16 %v719, %v710
    %v747 = vpack.c.b16 %v720, %v711
    %v748 = vpack.c.b16 %v730, %v721
    %v749 = vpack.c.b16 %v731, %v722
    %v750 = vpack.c.b16 %v732, %v723
    %v751 = vpack.c.b16 %v733, %v724
    %v752 = vpack.c.b16 %v734, %v725
    %v753 = vpack.c.b16 %v735, %v726
    %v754 = vpack.c.b16 %v736, %v727
    %v755 = vpack.c.b16 %v737, %v728
    %v756 = vpack.c.b16 %v738, %v729
    %v776 = vsel %vm496, %v613, 0
    %778 = vmatprep.subr.bf16.mxu0 0
    %779 = vmatpush1.bf16.msra.mxu0 0
    %780 = vmatprep.subr.bf16.mxu0 0
    %781 = vmatpush1.bf16.msra.mxu0 0
    %782 = vmatprep.subr.bf16.mxu0 0
    %783 = vmatpush1.bf16.msra.mxu0 0
    %784 = vmatprep.subr.bf16.mxu0 0
    %785 = vmatpush1.bf16.msra.mxu0 0
    %786 = vmatprep.subr.bf16.mxu0 0
    %787 = vmatpush1.bf16.msra.mxu0 0
    %788 = vmatprep.subr.bf16.mxu0 0
    %789 = vmatpush1.bf16.msra.mxu0 0
    %790 = vmatprep.subr.bf16.mxu0 %v749
    %791 = vmatpush1.bf16.msra.mxu0 %v748
    %792 = vmatprep.subr.bf16.mxu0 %v740
    %793 = vmatpush1.bf16.msra.mxu0 %v739
    %794 = vmatprep.subr.bf16.mxu0 0
    %795 = vmatpush2.bf16.msra.mxu0 0
    %796 = vmatprep.subr.bf16.mxu0 0
    %797 = vmatpush2.bf16.msra.mxu0 0
    %798 = vmatprep.subr.bf16.mxu0 0
    %799 = vmatpush2.bf16.msra.mxu0 0
    %800 = vmatprep.subr.bf16.mxu0 0
    %801 = vmatpush2.bf16.msra.mxu0 0
    %802 = vmatprep.subr.bf16.mxu0 0
    %803 = vmatpush2.bf16.msra.mxu0 0
    %804 = vmatprep.subr.bf16.mxu0 0
    %805 = vmatpush2.bf16.msra.mxu0 0
    %806 = vmatprep.subr.bf16.mxu0 0
    %807 = vmatpush2.bf16.msra.mxu0 0
    %808 = vmatprep.subr.bf16.mxu0 0
    %809 = vmatpush2.bf16.msra.mxu0 0
    %810 = vmatprep.mubr.bf16.mxu0 0
    %811 = vmatmul.mubr.bf16.gmra.mxu0 %v776
    %v812 = vpop.f32.mrf.mxu0
    %v813 = vadd.f32 %v641, %v812
    %v814 = vpop.f32.mrf.mxu0
    %v815 = vadd.f32 %v645, %v814
    %v816 = vpop.f32.mrf.mxu0
    %v817 = vpop.f32.mrf.mxu0
    %818 = vdwg.mxu0
    %819 = vmatprep.subr.bf16.mxu0 0
    %820 = vmatpush1.bf16.msra.mxu0 0
    %821 = vmatprep.subr.bf16.mxu0 0
    %822 = vmatpush1.bf16.msra.mxu0 0
    %823 = vmatprep.subr.bf16.mxu0 0
    %824 = vmatpush1.bf16.msra.mxu0 0
    %825 = vmatprep.subr.bf16.mxu0 0
    %826 = vmatpush1.bf16.msra.mxu0 0
    %827 = vmatprep.subr.bf16.mxu0 0
    %828 = vmatpush1.bf16.msra.mxu0 0
    %829 = vmatprep.subr.bf16.mxu0 0
    %830 = vmatpush1.bf16.msra.mxu0 0
    %831 = vmatprep.subr.bf16.mxu0 %v751
    %832 = vmatpush1.bf16.msra.mxu0 %v750
    %833 = vmatprep.subr.bf16.mxu0 %v742
    %834 = vmatpush1.bf16.msra.mxu0 %v741
    %835 = vmatprep.subr.bf16.mxu0 0
    %836 = vmatpush2.bf16.msra.mxu0 0
    %837 = vmatprep.subr.bf16.mxu0 0
    %838 = vmatpush2.bf16.msra.mxu0 0
    %839 = vmatprep.subr.bf16.mxu0 0
    %840 = vmatpush2.bf16.msra.mxu0 0
    %841 = vmatprep.subr.bf16.mxu0 0
    %842 = vmatpush2.bf16.msra.mxu0 0
    %843 = vmatprep.subr.bf16.mxu0 0
    %844 = vmatpush2.bf16.msra.mxu0 0
    %845 = vmatprep.subr.bf16.mxu0 0
    %846 = vmatpush2.bf16.msra.mxu0 0
    %847 = vmatprep.subr.bf16.mxu0 0
    %848 = vmatpush2.bf16.msra.mxu0 0
    %849 = vmatprep.subr.bf16.mxu0 0
    %850 = vmatpush2.bf16.msra.mxu0 0
    %851 = vmatprep.mubr.bf16.mxu0 0
    %852 = vmatmul.mubr.bf16.gmra.mxu0 %v776
    %v853 = vpop.f32.mrf.mxu0
    %v854 = vadd.f32 %v649, %v853
    %v855 = vpop.f32.mrf.mxu0
    %v856 = vadd.f32 %v653, %v855
    %v857 = vpop.f32.mrf.mxu0
    %v858 = vpop.f32.mrf.mxu0
    %859 = vdwg.mxu0
    %860 = vmatprep.subr.bf16.mxu0 0
    %861 = vmatpush1.bf16.msra.mxu0 0
    %862 = vmatprep.subr.bf16.mxu0 0
    %863 = vmatpush1.bf16.msra.mxu0 0
    %864 = vmatprep.subr.bf16.mxu0 0
    %865 = vmatpush1.bf16.msra.mxu0 0
    %866 = vmatprep.subr.bf16.mxu0 0
    %867 = vmatpush1.bf16.msra.mxu0 0
    %868 = vmatprep.subr.bf16.mxu0 0
    %869 = vmatpush1.bf16.msra.mxu0 0
    %870 = vmatprep.subr.bf16.mxu0 0
    %871 = vmatpush1.bf16.msra.mxu0 0
    %872 = vmatprep.subr.bf16.mxu0 %v753
    %873 = vmatpush1.bf16.msra.mxu0 %v752
    %874 = vmatprep.subr.bf16.mxu0 %v744
    %875 = vmatpush1.bf16.msra.mxu0 %v743
    %876 = vmatprep.subr.bf16.mxu0 0
    %877 = vmatpush2.bf16.msra.mxu0 0
    %878 = vmatprep.subr.bf16.mxu0 0
    %879 = vmatpush2.bf16.msra.mxu0 0
    %880 = vmatprep.subr.bf16.mxu0 0
    %881 = vmatpush2.bf16.msra.mxu0 0
    %882 = vmatprep.subr.bf16.mxu0 0
    %883 = vmatpush2.bf16.msra.mxu0 0
    %884 = vmatprep.subr.bf16.mxu0 0
    %885 = vmatpush2.bf16.msra.mxu0 0
    %886 = vmatprep.subr.bf16.mxu0 0
    %887 = vmatpush2.bf16.msra.mxu0 0
    %888 = vmatprep.subr.bf16.mxu0 0
    %889 = vmatpush2.bf16.msra.mxu0 0
    %890 = vmatprep.subr.bf16.mxu0 0
    %891 = vmatpush2.bf16.msra.mxu0 0
    %892 = vmatprep.mubr.bf16.mxu0 0
    %893 = vmatmul.mubr.bf16.gmra.mxu0 %v776
    %v894 = vpop.f32.mrf.mxu0
    %v895 = vadd.f32 %v657, %v894
    %v896 = vpop.f32.mrf.mxu0
    %v897 = vadd.f32 %v661, %v896
    %v898 = vpop.f32.mrf.mxu0
    %v899 = vpop.f32.mrf.mxu0
    %900 = vdwg.mxu0
    %901 = vmatprep.subr.bf16.mxu0 0
    %902 = vmatpush1.bf16.msra.mxu0 0
    %903 = vmatprep.subr.bf16.mxu0 0
    %904 = vmatpush1.bf16.msra.mxu0 0
    %905 = vmatprep.subr.bf16.mxu0 0
    %906 = vmatpush1.bf16.msra.mxu0 0
    %907 = vmatprep.subr.bf16.mxu0 0
    %908 = vmatpush1.bf16.msra.mxu0 0
    %909 = vmatprep.subr.bf16.mxu0 0
    %910 = vmatpush1.bf16.msra.mxu0 0
    %911 = vmatprep.subr.bf16.mxu0 0
    %912 = vmatpush1.bf16.msra.mxu0 0
    %913 = vmatprep.subr.bf16.mxu0 %v755
    %914 = vmatpush1.bf16.msra.mxu0 %v754
    %915 = vmatprep.subr.bf16.mxu0 %v746
    %916 = vmatpush1.bf16.msra.mxu0 %v745
    %917 = vmatprep.subr.bf16.mxu0 0
    %918 = vmatpush2.bf16.msra.mxu0 0
    %919 = vmatprep.subr.bf16.mxu0 0
    %920 = vmatpush2.bf16.msra.mxu0 0
    %921 = vmatprep.subr.bf16.mxu0 0
    %922 = vmatpush2.bf16.msra.mxu0 0
    %923 = vmatprep.subr.bf16.mxu0 0
    %924 = vmatpush2.bf16.msra.mxu0 0
    %925 = vmatprep.subr.bf16.mxu0 0
    %926 = vmatpush2.bf16.msra.mxu0 0
    %927 = vmatprep.subr.bf16.mxu0 0
    %928 = vmatpush2.bf16.msra.mxu0 0
    %929 = vmatprep.subr.bf16.mxu0 0
    %930 = vmatpush2.bf16.msra.mxu0 0
    %931 = vmatprep.subr.bf16.mxu0 0
    %932 = vmatpush2.bf16.msra.mxu0 0
    %933 = vmatprep.mubr.bf16.mxu0 0
    %934 = vmatmul.mubr.bf16.gmra.mxu0 %v776
    %v935 = vpop.f32.mrf.mxu0
    %v936 = vadd.f32 %v665, %v935
    %v937 = vpop.f32.mrf.mxu0
    %v938 = vadd.f32 %v669, %v937
    %v939 = vpop.f32.mrf.mxu0
    %v940 = vpop.f32.mrf.mxu0
    %941 = vdwg.mxu0
    %942 = vmatprep.subr.bf16.mxu0 0
    %943 = vmatpush1.bf16.msra.mxu0 0
    %944 = vmatprep.subr.bf16.mxu0 0
    %945 = vmatpush1.bf16.msra.mxu0 0
    %946 = vmatprep.subr.bf16.mxu0 0
    %947 = vmatpush1.bf16.msra.mxu0 0
    %948 = vmatprep.subr.bf16.mxu0 0
    %949 = vmatpush1.bf16.msra.mxu0 0
    %950 = vmatprep.subr.bf16.mxu0 0
    %951 = vmatpush1.bf16.msra.mxu0 0
    %952 = vmatprep.subr.bf16.mxu0 0
    %953 = vmatpush1.bf16.msra.mxu0 0
    %954 = vmatprep.subr.bf16.mxu0 0
    %955 = vmatpush1.bf16.msra.mxu0 %v756
    %956 = vmatprep.subr.bf16.mxu0 0
    %957 = vmatpush1.bf16.msra.mxu0 %v747
    %958 = vmatprep.subr.bf16.mxu0 0
    %959 = vmatpush2.bf16.msra.mxu0 0
    %960 = vmatprep.subr.bf16.mxu0 0
    %961 = vmatpush2.bf16.msra.mxu0 0
    %962 = vmatprep.subr.bf16.mxu0 0
    %963 = vmatpush2.bf16.msra.mxu0 0
    %964 = vmatprep.subr.bf16.mxu0 0
    %965 = vmatpush2.bf16.msra.mxu0 0
    %966 = vmatprep.subr.bf16.mxu0 0
    %967 = vmatpush2.bf16.msra.mxu0 0
    %968 = vmatprep.subr.bf16.mxu0 0
    %969 = vmatpush2.bf16.msra.mxu0 0
    %970 = vmatprep.subr.bf16.mxu0 0
    %971 = vmatpush2.bf16.msra.mxu0 0
    %972 = vmatprep.subr.bf16.mxu0 0
    %973 = vmatpush2.bf16.msra.mxu0 0
    %974 = vmatprep.mubr.bf16.mxu0 0
    %975 = vmatmul.mubr.bf16.gmra.mxu0 %v776
    %v976 = vpop.f32.mrf.mxu0
    %v977 = vadd.f32 %v673, %v976
    %v978 = vpop.f32.mrf.mxu0
    %v979 = vpop.f32.mrf.mxu0
    %v980 = vpop.f32.mrf.mxu0
    %981 = vdwg.mxu0
    %v982 = vlaneseq
    %v983 = vand.u32 %v982, 127
    %v984 = vadd.s32 %v983, 128
    %v985 = vadd.s32 %v983, 256
    %v986 = vadd.s32 %v983, 384
    %v987 = vadd.s32 %v983, 512
    %v988 = vadd.s32 %v983, 640
    %v989 = vadd.s32 %v983, 768
    %v990 = vadd.s32 %v983, 896
    %v991 = vadd.s32 %v983, 1024
    %vm992 = vcmp.lt.s32.totalorder %v983, 560
    %vm993 = vcmp.lt.s32.totalorder %v984, 560
    %vm994 = vcmp.lt.s32.totalorder %v985, 560
    %vm995 = vcmp.lt.s32.totalorder %v986, 560
    %vm996 = vcmp.lt.s32.totalorder %v987, 560
    %vm997 = vcmp.lt.s32.totalorder %v988, 560
    %vm998 = vcmp.lt.s32.totalorder %v989, 560
    %vm999 = vcmp.lt.s32.totalorder %v990, 560
    %vm1000 = vcmp.lt.s32.totalorder %v991, 560
    %v1001 = vxor.u32 %v813, 2147483648
    %v1002 = vxor.u32 %v815, 2147483648
    %v1003 = vxor.u32 %v854, 2147483648
    %v1004 = vxor.u32 %v856, 2147483648
    %v1005 = vxor.u32 %v895, 2147483648
    %v1006 = vxor.u32 %v897, 2147483648
    %v1007 = vxor.u32 %v936, 2147483648
    %v1008 = vxor.u32 %v938, 2147483648
    %v1009 = vxor.u32 %v977, 2147483648
    %v1010 = vmul.f32 %v1001, 1.442695
    %v1011 = vpow.pop %v1010
    %v1012 = vmul.f32 %v1002, 1.442695
    %v1013 = vpow.pop %v1012
    %v1014 = vmul.f32 %v1003, 1.442695
    %v1015 = vpow.pop %v1014
    %v1016 = vmul.f32 %v1004, 1.442695
    %v1017 = vpow.pop %v1016
    %v1018 = vmul.f32 %v1005, 1.442695
    %v1019 = vpow.pop %v1018
    %v1020 = vmul.f32 %v1006, 1.442695
    %v1021 = vpow.pop %v1020
    %v1022 = vmul.f32 %v1007, 1.442695
    %v1023 = vpow.pop %v1022
    %v1024 = vmul.f32 %v1008, 1.442695
    %v1025 = vpow.pop %v1024
    %v1026 = vmul.f32 %v1009, 1.442695
    %v1027 = vpow.pop %v1026
    %v1028 = vadd.f32 %v1011, 1.0
    %v1029 = vadd.f32 %v1013, 1.0
    %v1030 = vadd.f32 %v1015, 1.0
    %v1031 = vadd.f32 %v1017, 1.0
    %v1032 = vadd.f32 %v1019, 1.0
    %v1033 = vadd.f32 %v1021, 1.0
    %v1034 = vadd.f32 %v1023, 1.0
    %v1035 = vadd.f32 %v1025, 1.0
    %v1036 = vadd.f32 %v1027, 1.0
    %v1037 = vrcp.pop %v1028
    %v1038 = vmul.f32 1.0, %v1037
    %v1039 = vrcp.pop %v1029
    %v1040 = vmul.f32 1.0, %v1039
    %v1041 = vrcp.pop %v1030
    %v1042 = vmul.f32 1.0, %v1041
    %v1043 = vrcp.pop %v1031
    %v1044 = vmul.f32 1.0, %v1043
    %v1045 = vrcp.pop %v1032
    %v1046 = vmul.f32 1.0, %v1045
    %v1047 = vrcp.pop %v1033
    %v1048 = vmul.f32 1.0, %v1047
    %v1049 = vrcp.pop %v1034
    %v1050 = vmul.f32 1.0, %v1049
    %v1051 = vrcp.pop %v1035
    %v1052 = vmul.f32 1.0, %v1051
    %v1053 = vrcp.pop %v1036
    %v1054 = vmul.f32 1.0, %v1053
    %v1055 = vtanh.pop %v813
    %v1056 = vtanh.pop %v815
    %v1057 = vtanh.pop %v854
    %v1058 = vtanh.pop %v856
    %v1059 = vtanh.pop %v895
    %v1060 = vtanh.pop %v897
    %v1061 = vtanh.pop %v936
    %v1062 = vtanh.pop %v938
    %v1063 = vtanh.pop %v977
    %v1064 = vsel %vm992, %v1038, %v1055
    %v1065 = vsel %vm993, %v1040, %v1056
    %v1066 = vsel %vm994, %v1042, %v1057
    %v1067 = vsel %vm995, %v1044, %v1058
    %v1068 = vsel %vm996, %v1046, %v1059
    %v1069 = vsel %vm997, %v1048, %v1060
    %v1070 = vsel %vm998, %v1050, %v1061
    %v1071 = vsel %vm999, %v1052, %v1062
    %v1072 = vsel %vm1000, %v1054, %v1063
    %1073 = vst [vmem:[#allocation4] sm:$0xff] %v1064
    %1074 = vst [vmem:[#allocation4 + $0x8] sm:$0xff] %v1065
    %1075 = vst [vmem:[#allocation4 + $0x10] sm:$0xff] %v1066
    %1076 = vst [vmem:[#allocation4 + $0x18] sm:$0xff] %v1067
    %1077 = vst [vmem:[#allocation4 + $0x20] sm:$0xff] %v1068
    %1078 = vst [vmem:[#allocation4 + $0x28] sm:$0xff] %v1069
    %1079 = vst [vmem:[#allocation4 + $0x30] sm:$0xff] %v1070
    %1080 = vst [vmem:[#allocation4 + $0x38] sm:$0xff] %v1071
    %1081 = vst [vmem:[#allocation4 + $0x40] sm:$0xff] %v1072
    // Predicated region
    $region42: #{tpu_custom_call.1} parent=1 // pred_check
      _
    $region43: #{tpu_custom_call.1} parent=1 // pred_check_branch
      %1083 = sbr.rel (0) target = $region45
    $region44: #{tpu_custom_call.1} parent=1 // pred_region
      %s1085 = ssub.s32 128, 128
      %1086 = vsyncadd [#allocation3], %s1085
      %s1088 = sshll.u32 [#allocation2], 4
      %s1089 = int_to_ptr.vmem [resolvable:$true] %s1088
      %1091 = dma.vmem_to_hbm [thread:$0]  %s1089, 128, %s10, [#allocation3]
    $region45: #{tpu_custom_call.1} parent=1 // pred_fallthru
      _
    // Predicated region
    $region46: #{tpu_custom_call.1} parent=1 // pred_check
      _
    $region47: #{tpu_custom_call.1} parent=1 // pred_check_branch
      %1093 = sbr.rel (0) target = $region49
    $region48: #{tpu_custom_call.1} parent=1 // pred_region
      %s1095 = ssub.s32 1152, 1152
      %1096 = vsyncadd [#allocation5], %s1095
      %s1098 = sshll.u32 [#allocation4], 4
      %s1099 = int_to_ptr.vmem [resolvable:$true] %s1098
      %1101 = dma.vmem_to_hbm [thread:$0]  %s1099, 1152, %s11, [#allocation5]
    $region49: #{tpu_custom_call.1} parent=1 // pred_fallthru
      _
    // Predicated region
    $region50: #{tpu_custom_call.1} parent=1 // pred_check
      _
    $region51: #{tpu_custom_call.1} parent=1 // pred_check_branch
      %1103 = sbr.rel (0) target = $region53
    $region52: #{tpu_custom_call.1} parent=1 // pred_region
      %1104 = dma.done [#allocation3], 128
    $region53: #{tpu_custom_call.1} parent=1 // pred_fallthru
      _
    // Predicated region
    $region54: #{tpu_custom_call.1} parent=1 // pred_check
      _
    $region55: #{tpu_custom_call.1} parent=1 // pred_check_branch
      %1106 = sbr.rel (0) target = $region57
    $region56: #{tpu_custom_call.1} parent=1 // pred_region
      %1107 = dma.done [#allocation5], 1152
    $region57: #{tpu_custom_call.1} parent=1 // pred_fallthru
      _
    %1108 = vsyncpa [#allocation3], 1
    %1109 = vsyncpa [#allocation5], 1

</llo_original>
